<compile_context>
chip_gen: v6e
topology: v6e:2x2x1
jax: 0.10.0
libtpu: 0.0.40
codegen_flags: <defaults>
</compile_context>

<pallas_src>
import functools

import jax
import jax.numpy as jnp
from jax import lax
from jax.experimental import pallas as pl
from jax.experimental.pallas import tpu as pltpu

D_IN = 48            # feature width of x
D_ATTN = 8           # q/k/v projection width
D_VQK = 3 * D_ATTN   # fused [v|q|k] projection width
_INV_SQRT8 = 1.0 / (8.0 ** 0.5)


def _round_up(a, m):
    return (a + m - 1) // m * m


def _pass1_kernel(x_ref, wvqk_ref, v_ref, gram_ref, *, tb, tps, batch, need_mask):
    """Pass 1: fused [v|q|k] projection per batch tile; cache v; accumulate the
    (24, 24) gram of [v|q|k] (its q.T@k block is the un-normalized score matrix)."""
    t = pl.program_id(1)

    @pl.when(t == 0)
    def _init():
        gram_ref[...] = jnp.zeros_like(gram_ref)

    x = x_ref[...]                                                        # (tb, 48)
    vqk = jnp.dot(x, wvqk_ref[...], preferred_element_type=jnp.float32)   # (tb, 24)

    if need_mask:
        # Zero rows past the end of the real batch: the ragged last tile, and the
        # duplicated (clamped) tile the second core sees when n_tiles is odd.
        c = pl.program_id(0)
        base = (c * tps + t) * tb
        rows = lax.broadcasted_iota(jnp.int32, (tb, 1), 0) + base
        vqk = jnp.where(rows < batch, vqk, 0.0)

    # v occupies lanes [0, 8) of the fused projection -> no cross-lane shift.
    v_ref[...] = vqk[:, 0:D_ATTN]
    # gram[a, b] += sum_r vqk[r, a] * vqk[r, b]  (batch-tile contraction on MXU)
    gram_ref[...] += lax.dot_general(
        vqk, vqk, (((0,), (0,)), ((), ())), preferred_element_type=jnp.float32)


def _pass2_kernel(w2t_ref, v_ref, o_ref):
    """Pass 2 (fully parallel over batch tiles): out_tile = v_tile @ (s @ Wo.T)."""
    o_ref[...] = jnp.dot(
        v_ref[...], w2t_ref[...], preferred_element_type=jnp.float32
    ).astype(o_ref.dtype)


@functools.partial(jax.jit, static_argnames=("batch_tile",))
def ultimus_forward(x, wk, wq, wv, wo, *, batch_tile=8192):
    """x: (B, 48) f32; wk/wq/wv: torch layout (8, 48); wo: torch layout (48, 8)."""
    B, F = x.shape
    assert F == D_IN
    assert batch_tile % 8 == 0

    # Batch tile: multiple of 8 sublanes; large by default so per-grid-step
    # overhead is amortized on this HBM-bound op.
    tb = min(batch_tile, _round_up(B, 8))
    n_tiles = pl.cdiv(B, tb)
    # Leading "parallel" axis of size 2 -> both v7x TensorCores stream disjoint
    # halves of the batch in pass 1 (plain outer loop on single-core chips).
    n_core = 2 if n_tiles >= 2 else 1
    tps = pl.cdiv(n_tiles, n_core)          # logical tiles per core
    v_rows = n_core * tps * tb              # v over-allocated so no OOB block writes
    need_mask = v_rows > B

    # Fused projection weight, columns ordered [v | q | k].
    wvqk_t = jnp.concatenate([wv, wq, wk], axis=0).T                    # (48, 24)

    itemsize = 4  # f32
    vmem_limit = int(min(100 * 2**20, 2048 * tb + 8 * 2**20))

    # ---------------- pass 1: v projection + score (gram) accumulation --------
    cost1 = pl.CostEstimate(
        flops=int(2 * v_rows * D_IN * D_VQK + 2 * v_rows * D_VQK * D_VQK),
        transcendentals=0,
        bytes_accessed=int(itemsize * (B * D_IN + v_rows * D_ATTN
                                       + D_IN * D_VQK + n_core * D_VQK * D_VQK)),
    )
    kernel1 = functools.partial(
        _pass1_kernel, tb=tb, tps=tps, batch=B, need_mask=need_mask)
    v_arr, gram_parts = pl.pallas_call(
        kernel1,
        out_shape=(jax.ShapeDtypeStruct((v_rows, D_ATTN), jnp.float32),
                   jax.ShapeDtypeStruct((n_core, D_VQK, D_VQK), jnp.float32)),
        grid_spec=pltpu.PrefetchScalarGridSpec(
            num_scalar_prefetch=0,
            grid=(n_core, tps),
            in_specs=[
                # x tile; clamp so the duplicate step on an odd tile count
                # re-reads a valid block (its rows are fully masked anyway).
                pl.BlockSpec(
                    (tb, D_IN),
                    lambda c, t: (jnp.minimum(c * tps + t, n_tiles - 1), 0)),
                pl.BlockSpec((D_IN, D_VQK), lambda c, t: (0, 0)),       # Wvqk (resident)
            ],
            out_specs=[
                pl.BlockSpec((tb, D_ATTN), lambda c, t: (c * tps + t, 0)),   # v cache
                pl.BlockSpec((None, D_VQK, D_VQK), lambda c, t: (c, 0, 0)),  # per-core gram
            ],
        ),
        compiler_params=pltpu.CompilerParams(
            dimension_semantics=("parallel", "arbitrary"),
            vmem_limit_bytes=vmem_limit,
        ),
        cost_estimate=cost1,
    )(x, wvqk_t)

    # ---------------- tiny combine: softmax + Wo fold (once, plain JAX) -------
    g = jnp.sum(gram_parts, axis=0)                                     # (24, 24)
    scores = g[D_ATTN:2 * D_ATTN, 2 * D_ATTN:3 * D_ATTN] * _INV_SQRT8   # q.T@k / sqrt(8)
    sm = jax.nn.softmax(scores, axis=1)                                 # (8, 8)
    # out = v @ s @ Wo.T = v @ w2t  with  w2t = s @ Wo.T : (8, 48)
    w2t = jnp.dot(sm, wo.T, precision=jax.lax.Precision.HIGHEST)

    # ---------------- pass 2: out = v @ w2t, parallel over batch tiles --------
    cost2 = pl.CostEstimate(
        flops=int(2 * n_tiles * tb * D_ATTN * D_IN),
        transcendentals=0,
        bytes_accessed=int(itemsize * (n_tiles * tb * D_ATTN + B * D_IN
                                       + D_ATTN * D_IN)),
    )
    out = pl.pallas_call(
        _pass2_kernel,
        out_shape=jax.ShapeDtypeStruct((B, D_IN), x.dtype),
        grid_spec=pltpu.PrefetchScalarGridSpec(
            num_scalar_prefetch=0,
            grid=(n_tiles,),
            in_specs=[
                pl.BlockSpec((D_ATTN, D_IN), lambda i: (0, 0)),         # w2t (resident)
                pl.BlockSpec((tb, D_ATTN), lambda i: (i, 0)),           # v tile
            ],
            out_specs=pl.BlockSpec((tb, D_IN), lambda i: (i, 0)),       # (B, 48) direct
        ),
        compiler_params=pltpu.CompilerParams(
            dimension_semantics=("parallel",),
            vmem_limit_bytes=vmem_limit,
        ),
        cost_estimate=cost2,
    )(w2t, v_arr)

    return out


def ultimus_reference(x, wk, wq, wv, wo):
    """Pure-JAX reference matching the PyTorch forward (full f32 precision)."""
    hp = jax.lax.Precision.HIGHEST
    k = jnp.dot(x, wk.T, precision=hp)
    q = jnp.dot(x, wq.T, precision=hp)
    v = jnp.dot(x, wv.T, precision=hp)
    s = jax.nn.softmax(
        jnp.dot(q.T, k, precision=hp) / jnp.sqrt(jnp.float32(8.0)), axis=1)
    pre = jnp.dot(v, s, precision=hp)
    return jnp.dot(pre, wo.T, precision=hp)


if __name__ == "__main__":
    key = jax.random.PRNGKey(0)
    kx, kk, kq, kv, ko, kx2 = jax.random.split(key, 6)

    F, D = 48, 8

    # torch.nn.Linear-style init: weight = (out, in), U[-1/sqrt(in), 1/sqrt(in)].
    def init_linear(k, out_f, in_f):
        bound = 1.0 / jnp.sqrt(jnp.float32(in_f))
        return jax.random.uniform(k, (out_f, in_f), jnp.float32, -bound, bound)

    wk = init_linear(kk, D, F)   # key:   (8, 48)
    wq = init_linear(kq, D, F)   # query: (8, 48)
    wv = init_linear(kv, D, F)   # value: (8, 48)
    wo = init_linear(ko, F, D)   # out:   (48, 8)

    # Small single-tile case (B = 2).
    x = jax.random.normal(kx, (2, F), dtype=jnp.float32)
    out = jax.block_until_ready(ultimus_forward(x, wk, wq, wv, wo))
    ref = ultimus_reference(x, wk, wq, wv, wo)
    assert out.shape == (2, F), out.shape
    assert jnp.allclose(out, ref, atol=1e-5, rtol=1e-5), (
        float(jnp.max(jnp.abs(out - ref))))

    # Multi-tile case exercising the ragged in-kernel mask, the 2-way core split
    # and the odd-tile-count clamp path (B=40, tile=16 -> 3 logical tiles).
    x2 = jax.random.normal(kx2, (40, F), dtype=jnp.float32)
    out2 = jax.block_until_ready(ultimus_forward(x2, wk, wq, wv, wo, batch_tile=16))
    ref2 = ultimus_reference(x2, wk, wq, wv, wo)
    assert out2.shape == (40, F), out2.shape
    assert jnp.allclose(out2, ref2, atol=1e-5, rtol=1e-5), (
        float(jnp.max(jnp.abs(out2 - ref2))))

    print("KERNEL_OK")
</pallas_src>

<mosaic_0001>
module attributes {stable_mosaic.version = 11 : i64} {
  func.func @_pass1_kernel(%arg0: i32, %arg1: i32, %arg2: memref<8x48xf32, #tpu.memory_space<vmem>>, %arg3: memref<48x24xf32, #tpu.memory_space<vmem>>, %arg4: memref<8x8xf32, #tpu.memory_space<vmem>>, %arg5: memref<1x24x24xf32, #tpu.memory_space<vmem>>) attributes {dimension_semantics = [#tpu.dimension_semantics<parallel>, #tpu.dimension_semantics<arbitrary>], iteration_bounds = array<i64: 1, 1>, scalar_prefetch = 0 : i64, scratch_operands = 0 : i64, tpu.core_type = #tpu.core_type<tc>, window_params = [{transform_indices = @transform_0, window_bounds = array<i64: 8, 48>}, {pipeline_mode = #tpu.pipeline_mode<synchronous>, transform_indices = @transform_1, window_bounds = array<i64: 48, 24>}, {transform_indices = @transform_2, window_bounds = array<i64: 8, 8>}, {transform_indices = @transform_3, window_bounds = array<i64: 1, 24, 24>}]} {
    %c0_i32 = arith.constant 0 : i32
    %0 = arith.cmpi eq, %arg1, %c0_i32 : i32
    %1 = arith.extui %0 : i1 to i32
    %c0_i32_0 = arith.constant 0 : i32
    %2 = arith.cmpi ne, %1, %c0_i32_0 : i32
    scf.if %2 {
      %cst_14 = arith.constant 0.000000e+00 : f32
      %27 = vector.broadcast %cst_14 : f32 to vector<24x24xf32>
      %c0_15 = arith.constant 0 : index
      %c0_16 = arith.constant 0 : index
      %c0_17 = arith.constant 0 : index
      %28 = vector.load %arg5[%c0_15, %c0_16, %c0_17] : memref<1x24x24xf32, #tpu.memory_space<vmem>>, vector<1x24x24xf32>
      %29 = vector.shape_cast %28 : vector<1x24x24xf32> to vector<24x24xf32>
      %30 = vector.shape_cast %27 : vector<24x24xf32> to vector<1x24x24xf32>
      tpu.vector_store %arg5[%c0_15, %c0_16, %c0_17], %30 {strides = array<i32>} : memref<1x24x24xf32, #tpu.memory_space<vmem>>, vector<1x24x24xf32>,
    } else {
    }
    %c0 = arith.constant 0 : index
    %c0_1 = arith.constant 0 : index
    %3 = vector.load %arg2[%c0, %c0_1] : memref<8x48xf32, #tpu.memory_space<vmem>>, vector<8x48xf32>
    %c0_2 = arith.constant 0 : index
    %c0_3 = arith.constant 0 : index
    %4 = vector.load %arg3[%c0_2, %c0_3] : memref<48x24xf32, #tpu.memory_space<vmem>>, vector<48x24xf32>
    %cst = arith.constant dense<0.000000e+00> : vector<8x24xf32>
    %5 = tpu.matmul %3, %4, %cst {dimension_numbers = #tpu.dot_dimension_numbers<[1], [0], [0], [1], [0, 0, 1, 1], [], []>} : vector<8x48xf32>, vector<48x24xf32>, vector<8x24xf32> -> vector<8x24xf32>
    %c1_i32 = arith.constant 1 : i32
    %6 = arith.muli %arg0, %c1_i32 : i32
    %7 = arith.addi %6, %arg1 : i32
    %c8_i32 = arith.constant 8 : i32
    %8 = arith.muli %7, %c8_i32 : i32
    %9 = tpu.iota {dimensions = array<i32: 0>} : vector<8x1xi32>
    %10 = vector.broadcast %8 : i32 to vector<8x1xi32>
    %11 = arith.addi %9, %10 : vector<8x1xi32>
    %c2_i32 = arith.constant 2 : i32
    %12 = vector.broadcast %c2_i32 : i32 to vector<8x1xi32>
    %13 = arith.cmpi slt, %11, %12 : vector<8x1xi32>
    %cst_4 = arith.constant 0.000000e+00 : f32
    %14 = vector.shape_cast %13 : vector<8x1xi1> to vector<8x1xi1>
    %15 = vector.broadcast %14 : vector<8x1xi1> to vector<8x24xi1>
    %16 = vector.broadcast %cst_4 : f32 to vector<8x24xf32>
    %17 = arith.select %15, %5, %16 : vector<8x24xi1>, vector<8x24xf32>
    %18 = vector.extract_strided_slice %17 {offsets = [0, 0], sizes = [8, 8], strides = [1, 1]} : vector<8x24xf32> to vector<8x8xf32>
    %c0_5 = arith.constant 0 : index
    %c0_6 = arith.constant 0 : index
    %19 = vector.load %arg4[%c0_5, %c0_6] : memref<8x8xf32, #tpu.memory_space<vmem>>, vector<8x8xf32>
    tpu.vector_store %arg4[%c0_5, %c0_6], %18 {strides = array<i32>} : memref<8x8xf32, #tpu.memory_space<vmem>>, vector<8x8xf32>,
    %c0_7 = arith.constant 0 : index
    %c0_8 = arith.constant 0 : index
    %c0_9 = arith.constant 0 : index
    %20 = vector.load %arg5[%c0_7, %c0_8, %c0_9] : memref<1x24x24xf32, #tpu.memory_space<vmem>>, vector<1x24x24xf32>
    %21 = vector.shape_cast %20 : vector<1x24x24xf32> to vector<24x24xf32>
    %cst_10 = arith.constant dense<0.000000e+00> : vector<24x24xf32>
    %22 = tpu.matmul %17, %17, %cst_10 {dimension_numbers = #tpu.dot_dimension_numbers<[0], [0], [1], [1], [0, 1, 1, 1], [], []>} : vector<8x24xf32>, vector<8x24xf32>, vector<24x24xf32> -> vector<24x24xf32>
    %23 = arith.addf %21, %22 : vector<24x24xf32>
    %c0_11 = arith.constant 0 : index
    %c0_12 = arith.constant 0 : index
    %c0_13 = arith.constant 0 : index
    %24 = vector.load %arg5[%c0_11, %c0_12, %c0_13] : memref<1x24x24xf32, #tpu.memory_space<vmem>>, vector<1x24x24xf32>
    %25 = vector.shape_cast %24 : vector<1x24x24xf32> to vector<24x24xf32>
    %26 = vector.shape_cast %23 : vector<24x24xf32> to vector<1x24x24xf32>
    tpu.vector_store %arg5[%c0_11, %c0_12, %c0_13], %26 {strides = array<i32>} : memref<1x24x24xf32, #tpu.memory_space<vmem>>, vector<1x24x24xf32>,
    return
  }
  func.func @transform_0(%arg0: i32, %arg1: i32) -> (i32, i32) {
    %c1_i32 = arith.constant 1 : i32
    %0 = arith.muli %arg0, %c1_i32 : i32
    %1 = arith.addi %0, %arg1 : i32
    %c0_i32 = arith.constant 0 : i32
    %2 = arith.minsi %1, %c0_i32 : i32
    %c0_i32_0 = arith.constant 0 : i32
    %c0_i32_1 = arith.constant 0 : i32
    return %2, %c0_i32_0 : i32, i32
  }
  func.func @transform_1(%arg0: i32, %arg1: i32) -> (i32, i32) {
    %c0_i32 = arith.constant 0 : i32
    %c0_i32_0 = arith.constant 0 : i32
    %c0_i32_1 = arith.constant 0 : i32
    return %c0_i32, %c0_i32_0 : i32, i32
  }
  func.func @transform_2(%arg0: i32, %arg1: i32) -> (i32, i32) {
    %c1_i32 = arith.constant 1 : i32
    %0 = arith.muli %arg0, %c1_i32 : i32
    %1 = arith.addi %0, %arg1 : i32
    %c0_i32 = arith.constant 0 : i32
    %c0_i32_0 = arith.constant 0 : i32
    return %1, %c0_i32 : i32, i32
  }
  func.func @transform_3(%arg0: i32, %arg1: i32) -> (i32, i32, i32) {
    %c0_i32 = arith.constant 0 : i32
    %c0_i32_0 = arith.constant 0 : i32
    %c0_i32_1 = arith.constant 0 : i32
    return %arg0, %c0_i32, %c0_i32_0 : i32, i32, i32
  }
}

module attributes {stable_mosaic.version = 11 : i64} {
  func.func @_pass2_kernel(%arg0: i32, %arg1: memref<8x48xf32, #tpu.memory_space<vmem>>, %arg2: memref<8x8xf32, #tpu.memory_space<vmem>>, %arg3: memref<8x48xf32, #tpu.memory_space<vmem>>) attributes {dimension_semantics = [#tpu.dimension_semantics<parallel>], iteration_bounds = array<i64: 1>, scalar_prefetch = 0 : i64, scratch_operands = 0 : i64, tpu.core_type = #tpu.core_type<tc>, window_params = [{pipeline_mode = #tpu.pipeline_mode<synchronous>, transform_indices = @transform_0, window_bounds = array<i64: 8, 48>}, {transform_indices = @transform_1, window_bounds = array<i64: 8, 8>}, {transform_indices = @transform_2, window_bounds = array<i64: 8, 48>}]} {
    %c0 = arith.constant 0 : index
    %c0_0 = arith.constant 0 : index
    %0 = vector.load %arg2[%c0, %c0_0] : memref<8x8xf32, #tpu.memory_space<vmem>>, vector<8x8xf32>
    %c0_1 = arith.constant 0 : index
    %c0_2 = arith.constant 0 : index
    %1 = vector.load %arg1[%c0_1, %c0_2] : memref<8x48xf32, #tpu.memory_space<vmem>>, vector<8x48xf32>
    %cst = arith.constant dense<0.000000e+00> : vector<8x48xf32>
    %2 = tpu.matmul %0, %1, %cst {dimension_numbers = #tpu.dot_dimension_numbers<[1], [0], [0], [1], [0, 0, 1, 1], [], []>} : vector<8x8xf32>, vector<8x48xf32>, vector<8x48xf32> -> vector<8x48xf32>
    %c0_3 = arith.constant 0 : index
    %c0_4 = arith.constant 0 : index
    %3 = vector.load %arg3[%c0_3, %c0_4] : memref<8x48xf32, #tpu.memory_space<vmem>>, vector<8x48xf32>
    tpu.vector_store %arg3[%c0_3, %c0_4], %2 {strides = array<i32>} : memref<8x48xf32, #tpu.memory_space<vmem>>, vector<8x48xf32>,
    return
  }
  func.func @transform_0(%arg0: i32) -> (i32, i32) {
    %c0_i32 = arith.constant 0 : i32
    %c0_i32_0 = arith.constant 0 : i32
    %c0_i32_1 = arith.constant 0 : i32
    return %c0_i32, %c0_i32_0 : i32, i32
  }
  func.func @transform_1(%arg0: i32) -> (i32, i32) {
    %c0_i32 = arith.constant 0 : i32
    %c0_i32_0 = arith.constant 0 : i32
    return %arg0, %c0_i32 : i32, i32
  }
  func.func @transform_2(%arg0: i32) -> (i32, i32) {
    %c0_i32 = arith.constant 0 : i32
    %c0_i32_0 = arith.constant 0 : i32
    return %arg0, %c0_i32 : i32, i32
  }
}

</mosaic_0001>

<llo_original>
// kernel: ultimus_forward.3
$region0: #{ultimus_forward.3}
  #allocation0 [shape = 'u32[]', space=smem, size = 0x4, offset = 0x4, fixed_abs, tag = 'smem constant byte address 0x4 - core index']
  #allocation1 [shape = 'u32[144,128]{1,0:T(1,128)}', space=vmem, size = 0x12000, scoped, tag = 'internal scratch']
  %s0 = inlined_call_operand.vmem [shape: f32[8,48], index: 0, kind: input, shape index: {}]
  %s1 = inlined_call_operand.vmem [shape: f32[8,8], index: 1, kind: input, shape index: {}]
  %s2 = inlined_call_operand.hbm [shape: f32[2,48], index: 2, kind: output, shape index: {}]
  %s3 = sld [smem:[#allocation0]]
  $region18: #{ultimus_forward.3} parent=0
    _
  %s5 = ssub.s32 1, %s3
  %s6 = scalar_select 0, %s5, %s3
  $region1: #{ultimus_forward.3} parent=0
    #allocation2 [shape = 'u8[4096]{0}', space=vmem, size = 0x1000, scoped, tag = 'output window, operand 0, single buffered']
    #allocation3 [shape = 's32[1]{0}', space=sflag, size = 0x4, scoped, tag = 'scoped memory for ultimus_forward.3']
    %7 = vsyncpa [#allocation3], 0
    // Predicated region
    $region2: #{ultimus_forward.3} parent=1 // pred_check
      _
    $region3: #{ultimus_forward.3} parent=1 // pred_check_branch
      %9 = sbr.rel (0) target = $region5
    $region4: #{ultimus_forward.3} parent=1 // pred_region
      _
    $region5: #{ultimus_forward.3} parent=1 // pred_fallthru
      _
    // Predicated region
    $region6: #{ultimus_forward.3} parent=1 // pred_check
      _
    $region7: #{ultimus_forward.3} parent=1 // pred_check_branch
      %11 = sbr.rel (0) target = $region9
    $region8: #{ultimus_forward.3} parent=1 // pred_region
      _
    $region9: #{ultimus_forward.3} parent=1 // pred_fallthru
      _
    %v12 = vld [vmem:[%s1] sm:$0xff]
    %v13 = vld [vmem:[%s0] sm:$0xff]
    %vm14 = vcmask 64512
    %v16 = vsel %vm14, %v12, 0
    %18 = vmatprep.subr.mxu0 0.0
    %19 = vmatpush1.msra.mxu0 0.0
    %20 = vmatprep.subr.mxu0 0.0
    %21 = vmatpush1.msra.mxu0 0.0
    %22 = vmatprep.subr.mxu0 0.0
    %23 = vmatpush1.msra.mxu0 0.0
    %24 = vmatprep.subr.mxu0 0.0
    %25 = vmatpush1.msra.mxu0 0.0
    %26 = vmatprep.subr.mxu0 0.0
    %27 = vmatpush1.msra.mxu0 0.0
    %28 = vmatprep.subr.mxu0 0.0
    %29 = vmatpush1.msra.mxu0 0.0
    %30 = vmatprep.subr.mxu0 0.0
    %31 = vmatpush1.msra.mxu0 0.0
    %32 = vmatprep.subr.mxu0 0.0
    %33 = vmatpush1.msra.mxu0 0.0
    %34 = vmatprep.subr.mxu0 0.0
    %35 = vmatpush1.msra.mxu0 0.0
    %36 = vmatprep.subr.mxu0 0.0
    %37 = vmatpush1.msra.mxu0 0.0
    %38 = vmatprep.subr.mxu0 0.0
    %39 = vmatpush1.msra.mxu0 0.0
    %40 = vmatprep.subr.mxu0 0.0
    %41 = vmatpush1.msra.mxu0 0.0
    %42 = vmatprep.subr.mxu0 0.0
    %43 = vmatpush1.msra.mxu0 0.0
    %44 = vmatprep.subr.mxu0 0.0
    %45 = vmatpush1.msra.mxu0 0.0
    %46 = vmatprep.subr.mxu0 0.0
    %47 = vmatpush1.msra.mxu0 0.0
    %48 = vmatprep.subr.mxu0 0.0
    %49 = vmatpush1.msra.mxu0 %v13
    %50 = vmatprep.subr.mxu0 0.0
    %51 = vmatpush2.msra.mxu0 0.0
    %52 = vmatprep.subr.mxu0 0.0
    %53 = vmatpush2.msra.mxu0 0.0
    %54 = vmatprep.subr.mxu0 0.0
    %55 = vmatpush2.msra.mxu0 0.0
    %56 = vmatprep.subr.mxu0 0.0
    %57 = vmatpush2.msra.mxu0 0.0
    %58 = vmatprep.subr.mxu0 0.0
    %59 = vmatpush2.msra.mxu0 0.0
    %60 = vmatprep.subr.mxu0 0.0
    %61 = vmatpush2.msra.mxu0 0.0
    %62 = vmatprep.subr.mxu0 0.0
    %63 = vmatpush2.msra.mxu0 0.0
    %64 = vmatprep.subr.mxu0 0.0
    %65 = vmatpush2.msra.mxu0 0.0
    %66 = vmatprep.subr.mxu0 0.0
    %67 = vmatpush2.msra.mxu0 0.0
    %68 = vmatprep.subr.mxu0 0.0
    %69 = vmatpush2.msra.mxu0 0.0
    %70 = vmatprep.subr.mxu0 0.0
    %71 = vmatpush2.msra.mxu0 0.0
    %72 = vmatprep.subr.mxu0 0.0
    %73 = vmatpush2.msra.mxu0 0.0
    %74 = vmatprep.subr.mxu0 0.0
    %75 = vmatpush2.msra.mxu0 0.0
    %76 = vmatprep.subr.mxu0 0.0
    %77 = vmatpush2.msra.mxu0 0.0
    %78 = vmatprep.subr.mxu0 0.0
    %79 = vmatpush2.msra.mxu0 0.0
    %80 = vmatprep.subr.mxu0 0.0
    %81 = vmatpush2.msra.mxu0 0.0
    %82 = vmatprep.mubr.f32.mxu0 0.0
    %83 = vmatmul.mubr.f32.gmra.mxu0 %v16
    %v84 = vpop.f32.mrf.mxu0
    %v85 = vadd.f32 0.0, %v84
    %v86 = vpop.f32.mrf.mxu0
    %87 = vdwg.mxu0
    %vm88 = vcmask 392192
    %89 = vst.msk [vmem:[#allocation2] sm:$0xff] %vm88, %v85
    // Predicated region
    $region10: #{ultimus_forward.3} parent=1 // pred_check
      _
    $region11: #{ultimus_forward.3} parent=1 // pred_check_branch
      %91 = sbr.rel (0) target = $region13
    $region12: #{ultimus_forward.3} parent=1 // pred_region
      %s93 = ssub.s32 128, 32
      %94 = vsyncadd [#allocation3], %s93
      %s95 = sshll.u32 [#allocation2], 4
      %s96 = int_to_ptr.vmem [resolvable:$true] %s95
      %101 = dma.vmem_to_hbm [thread:$0]  %s96, 32, %s2, [#allocation3], 32, 32, 2
    $region13: #{ultimus_forward.3} parent=1 // pred_fallthru
      _
    // Predicated region
    $region14: #{ultimus_forward.3} parent=1 // pred_check
      _
    $region15: #{ultimus_forward.3} parent=1 // pred_check_branch
      %103 = sbr.rel (0) target = $region17
    $region16: #{ultimus_forward.3} parent=1 // pred_region
      %104 = dma.done [#allocation3], 128
    $region17: #{ultimus_forward.3} parent=1 // pred_fallthru
      _
    %105 = vsyncpa [#allocation3], 1

// kernel: ultimus_forward.2
$region0: #{ultimus_forward.2}
  #allocation0 [shape = 'u32[]', space=smem, size = 0x4, offset = 0x4, fixed_abs, tag = 'smem constant byte address 0x4 - core index']
  #allocation1 [shape = 'u32[144,128]{1,0:T(1,128)}', space=vmem, size = 0x12000, scoped, tag = 'internal scratch']
  %s0 = inlined_call_operand.vmem [shape: f32[2,48], index: 0, kind: input, shape index: {}]
  %s1 = inlined_call_operand.vmem [shape: f32[48,24], index: 1, kind: input, shape index: {}]
  %s2 = inlined_call_operand.vmem [shape: f32[8,8], index: 2, kind: output, shape index: {0}]
  %s3 = inlined_call_operand.vmem [shape: f32[1,24,24], index: 3, kind: output, shape index: {1}]
  %4 = xla_tuple %s2, %s3
  %s5 = sld [smem:[#allocation0]]
  $region30: #{ultimus_forward.2} parent=0
    _
  %s7 = ssub.s32 1, %s5
  %s8 = scalar_select 0, %s7, %s5
  // Predicated region
  $region2: #{ultimus_forward.2} parent=0 // pred_check
    _
  $region3: #{ultimus_forward.2} parent=0 // pred_check_branch
    %10 = sbr.rel (0) target = $region5
  $region4: #{ultimus_forward.2} parent=0 // pred_region
    %s11 = sadd.s32 0, 0
    %p12 = scmp.lt.s32.totalorder %s11, 0
    %s13 = scalar_select %p12, %s11, 0
    %s14 = smul.u32 4, %s13
    %s15 = ssub.s32 1, %s14
    %s16 = smul.u32 32, %s15
    %p17 = scmp.lt.s32.totalorder %s14, 0
    %s18 = scalar_select %p17, %s14, 0
    %s19 = smul.addr %s18, 2
    %s20 = scalar_lea.vmem %s0, %s19
    %s21 = sadd.s32 0, 0
    %p22 = scmp.lt.s32.totalorder %s21, 0
    %s23 = scalar_select %p22, %s21, 0
    %s24 = smul.u32 4, %s23
    %s25 = ssub.s32 1, %s24
    %s26 = smul.u32 32, %s25
  $region5: #{ultimus_forward.2} parent=0 // pred_fallthru
    _
  // Predicated region
  $region6: #{ultimus_forward.2} parent=0 // pred_check
    _
  $region7: #{ultimus_forward.2} parent=0 // pred_check_branch
    %28 = sbr.rel (0) target = $region9
  $region8: #{ultimus_forward.2} parent=0 // pred_region
    _
  $region9: #{ultimus_forward.2} parent=0 // pred_fallthru
    _
  %s29 = sadd.s32 0, 0
  %p30 = scmp.lt.s32.totalorder %s29, 0
  %s31 = scalar_select %p30, %s29, 0
  %s32 = smul.u32 4, %s31
  %s33 = ssub.s32 1, %s32
  %s34 = smul.u32 32, %s33
  %p35 = scmp.lt.s32.totalorder %s32, 0
  %s36 = scalar_select %p35, %s32, 0
  %s37 = smul.addr %s36, 2
  %s38 = scalar_lea.vmem %s0, %s37
  %s39 = sadd.s32 0, 0
  %p40 = scmp.lt.s32.totalorder %s39, 0
  %s41 = scalar_select %p40, %s39, 0
  %s42 = smul.addr %s41, 8
  %s43 = scalar_lea.vmem %s2, %s42
  %s44 = sadd.s32 0, 0
  %p45 = scmp.lt.s32.totalorder %s44, 0
  %s46 = scalar_select %p45, %s44, 0
  %s47 = smul.u32 4, %s46
  %s48 = ssub.s32 1, %s47
  %s49 = smul.u32 32, %s48
  %p50 = scmp.lt.s32.totalorder %s47, 0
  %s51 = scalar_select %p50, %s47, 0
  %s52 = smul.addr %s51, 2
  %s53 = scalar_lea.vmem %s0, %s52
  %s54 = sadd.s32 0, 0
  %p55 = scmp.lt.s32.totalorder %s54, 0
  %s56 = scalar_select %p55, %s54, 0
  %s57 = smul.u32 4, %s56
  %s58 = ssub.s32 1, %s57
  %s59 = smul.u32 32, %s58
  %s60 = sadd.s32 0, 0
  %p61 = scmp.lt.s32.totalorder %s60, 0
  %s62 = scalar_select %p61, %s60, 0
  %s63 = smul.addr %s62, 8
  %s64 = scalar_lea.vmem %s2, %s63
  %s65 = sadd.s32 0, 0
  %p66 = scmp.eq.s32.totalorder 0, 0
  // Predicated region
  $region10: #{ultimus_forward.2} parent=0 // pred_check
    %p67 = pneg %p66
  $region11: #{ultimus_forward.2} parent=0 // pred_check_branch
    %69 = sbr.rel (%p67) target = $region13
  $region12: #{ultimus_forward.2} parent=0 // pred_region
    %vm70 = vcmask 195584
    %71 = vst.msk [vmem:[%s3] sm:$0xff] %vm70, 0.0
    %72 = vst.msk [vmem:[%s3 + $0x8] sm:$0xff] %vm70, 0.0
    %73 = vst.msk [vmem:[%s3 + $0x10] sm:$0xff] %vm70, 0.0
  $region13: #{ultimus_forward.2} parent=0 // pred_fallthru
    _
  %v74 = vld [vmem:[%s53] sm:$0xff]
  %v75 = vld [vmem:[%s1] sm:$0xff]
  %v76 = vld [vmem:[%s1 + $0x8] sm:$0xff]
  %v77 = vld [vmem:[%s1 + $0x10] sm:$0xff]
  %v78 = vld [vmem:[%s1 + $0x18] sm:$0xff]
  %v79 = vld [vmem:[%s1 + $0x20] sm:$0xff]
  %v80 = vld [vmem:[%s1 + $0x28] sm:$0xff]
  %vm81 = vcmask 392192
  %v83 = vsel %vm81, %v74, 0
  %85 = vmatprep.subr.mxu0 0.0
  %86 = vmatpush1.msra.mxu0 0.0
  %87 = vmatprep.subr.mxu0 0.0
  %88 = vmatpush1.msra.mxu0 0.0
  %89 = vmatprep.subr.mxu0 0.0
  %90 = vmatpush1.msra.mxu0 0.0
  %91 = vmatprep.subr.mxu0 0.0
  %92 = vmatpush1.msra.mxu0 0.0
  %93 = vmatprep.subr.mxu0 0.0
  %94 = vmatpush1.msra.mxu0 0.0
  %95 = vmatprep.subr.mxu0 0.0
  %96 = vmatpush1.msra.mxu0 0.0
  %97 = vmatprep.subr.mxu0 0.0
  %98 = vmatpush1.msra.mxu0 0.0
  %99 = vmatprep.subr.mxu0 0.0
  %100 = vmatpush1.msra.mxu0 0.0
  %101 = vmatprep.subr.mxu0 0.0
  %102 = vmatpush1.msra.mxu0 0.0
  %103 = vmatprep.subr.mxu0 0.0
  %104 = vmatpush1.msra.mxu0 0.0
  %105 = vmatprep.subr.mxu0 0.0
  %106 = vmatpush1.msra.mxu0 %v80
  %107 = vmatprep.subr.mxu0 0.0
  %108 = vmatpush1.msra.mxu0 %v79
  %109 = vmatprep.subr.mxu0 0.0
  %110 = vmatpush1.msra.mxu0 %v78
  %111 = vmatprep.subr.mxu0 0.0
  %112 = vmatpush1.msra.mxu0 %v77
  %113 = vmatprep.subr.mxu0 0.0
  %114 = vmatpush1.msra.mxu0 %v76
  %115 = vmatprep.subr.mxu0 0.0
  %116 = vmatpush1.msra.mxu0 %v75
  %117 = vmatprep.subr.mxu0 0.0
  %118 = vmatpush2.msra.mxu0 0.0
  %119 = vmatprep.subr.mxu0 0.0
  %120 = vmatpush2.msra.mxu0 0.0
  %121 = vmatprep.subr.mxu0 0.0
  %122 = vmatpush2.msra.mxu0 0.0
  %123 = vmatprep.subr.mxu0 0.0
  %124 = vmatpush2.msra.mxu0 0.0
  %125 = vmatprep.subr.mxu0 0.0
  %126 = vmatpush2.msra.mxu0 0.0
  %127 = vmatprep.subr.mxu0 0.0
  %128 = vmatpush2.msra.mxu0 0.0
  %129 = vmatprep.subr.mxu0 0.0
  %130 = vmatpush2.msra.mxu0 0.0
  %131 = vmatprep.subr.mxu0 0.0
  %132 = vmatpush2.msra.mxu0 0.0
  %133 = vmatprep.subr.mxu0 0.0
  %134 = vmatpush2.msra.mxu0 0.0
  %135 = vmatprep.subr.mxu0 0.0
  %136 = vmatpush2.msra.mxu0 0.0
  %137 = vmatprep.subr.mxu0 0.0
  %138 = vmatpush2.msra.mxu0 0.0
  %139 = vmatprep.subr.mxu0 0.0
  %140 = vmatpush2.msra.mxu0 0.0
  %141 = vmatprep.subr.mxu0 0.0
  %142 = vmatpush2.msra.mxu0 0.0
  %143 = vmatprep.subr.mxu0 0.0
  %144 = vmatpush2.msra.mxu0 0.0
  %145 = vmatprep.subr.mxu0 0.0
  %146 = vmatpush2.msra.mxu0 0.0
  %147 = vmatprep.subr.mxu0 0.0
  %148 = vmatpush2.msra.mxu0 0.0
  %149 = vmatprep.mubr.f32.mxu0 0.0
  %150 = vmatmul.mubr.f32.gmra.mxu0 %v83
  %v151 = vpop.f32.mrf.mxu0
  %v152 = vadd.f32 0.0, %v151
  %v153 = vpop.f32.mrf.mxu0
  %154 = vdwg.mxu0
  %s155 = sadd.s32 0, 0
  %s156 = smul.u32 %s155, 8
  %v157 = vlaneseq
  %v158 = vshrl.u32 %v157, 7
  %v159 = vstv %s156
  %v160 = vadd.s32 %v158, %v159
  %vm161 = vcmp.lt.s32.totalorder %v160, 2
  %v162 = vsel %vm161, 1, 0
  %vm163 = vcmp.eq.s32.totalorder %v162, 1
  %v164 = vsel %vm163, %v152, 0.0
  %vm165 = vcmask 64512
  %166 = vst.msk [vmem:[%s64] sm:$0xff] %vm165, %v164
  %v167 = vld [vmem:[%s3] sm:$0xff]
  %v168 = vld [vmem:[%s3 + $0x8] sm:$0xff]
  %v169 = vld [vmem:[%s3 + $0x10] sm:$0xff]
  %170 = vxpose.xlu0.b32.start [1/16] %v164, 128
  %171 = vxpose.xlu0.b32.cont [2/16] 0.0, 128
  %172 = vxpose.xlu0.b32.cont [3/16] 0.0, 128
  %173 = vxpose.xlu0.b32.cont [4/16] 0.0, 128
  %174 = vxpose.xlu0.b32.cont [5/16] 0.0, 128
  %175 = vxpose.xlu0.b32.cont [6/16] 0.0, 128
  %176 = vxpose.xlu0.b32.cont [7/16] 0.0, 128
  %177 = vxpose.xlu0.b32.cont [8/16] 0.0, 128
  %178 = vxpose.xlu0.b32.cont [9/16] 0.0, 128
  %179 = vxpose.xlu0.b32.cont [10/16] 0.0, 128
  %180 = vxpose.xlu0.b32.cont [11/16] 0.0, 128
  %181 = vxpose.xlu0.b32.cont [12/16] 0.0, 128
  %182 = vxpose.xlu0.b32.cont [13/16] 0.0, 128
  %183 = vxpose.xlu0.b32.cont [14/16] 0.0, 128
  %184 = vxpose.xlu0.b32.cont [15/16] 0.0, 128
  %185 = vxpose.xlu0.b32.end [16/16] 0.0, 128
  %v186 = vpop.trf.xlu0
  %v187 = vpop.trf.xlu0
  %v188 = vpop.trf.xlu0
  %v189 = vpop.trf.xlu0
  %v190 = vpop.trf.xlu0
  %v191 = vpop.trf.xlu0
  %v192 = vpop.trf.xlu0
  %v193 = vpop.trf.xlu0
  %v194 = vpop.trf.xlu0
  %v195 = vpop.trf.xlu0
  %v196 = vpop.trf.xlu0
  %v197 = vpop.trf.xlu0
  %v198 = vpop.trf.xlu0
  %v199 = vpop.trf.xlu0
  %v200 = vpop.trf.xlu0
  %v201 = vpop.trf.xlu0
  %v203 = vsel %vm165, %v186, 0
  %v206 = vsel %vm165, %v187, 0
  %v209 = vsel %vm165, %v188, 0
  %211 = vmatprep.subr.mxu0 0.0
  %212 = vmatpush1.msra.mxu0 0.0
  %213 = vmatprep.subr.mxu0 0.0
  %214 = vmatpush1.msra.mxu0 0.0
  %215 = vmatprep.subr.mxu0 0.0
  %216 = vmatpush1.msra.mxu0 0.0
  %217 = vmatprep.subr.mxu0 0.0
  %218 = vmatpush1.msra.mxu0 0.0
  %219 = vmatprep.subr.mxu0 0.0
  %220 = vmatpush1.msra.mxu0 0.0
  %221 = vmatprep.subr.mxu0 0.0
  %222 = vmatpush1.msra.mxu0 0.0
  %223 = vmatprep.subr.mxu0 0.0
  %224 = vmatpush1.msra.mxu0 0.0
  %225 = vmatprep.subr.mxu0 0.0
  %226 = vmatpush1.msra.mxu0 0.0
  %227 = vmatprep.subr.mxu0 0.0
  %228 = vmatpush1.msra.mxu0 0.0
  %229 = vmatprep.subr.mxu0 0.0
  %230 = vmatpush1.msra.mxu0 0.0
  %231 = vmatprep.subr.mxu0 0.0
  %232 = vmatpush1.msra.mxu0 0.0
  %233 = vmatprep.subr.mxu0 0.0
  %234 = vmatpush1.msra.mxu0 0.0
  %235 = vmatprep.subr.mxu0 0.0
  %236 = vmatpush1.msra.mxu0 0.0
  %237 = vmatprep.subr.mxu0 0.0
  %238 = vmatpush1.msra.mxu0 0.0
  %239 = vmatprep.subr.mxu0 0.0
  %240 = vmatpush1.msra.mxu0 0.0
  %241 = vmatprep.subr.mxu0 0.0
  %242 = vmatpush1.msra.mxu0 %v164
  %243 = vmatprep.subr.mxu0 0.0
  %244 = vmatpush2.msra.mxu0 0.0
  %245 = vmatprep.subr.mxu0 0.0
  %246 = vmatpush2.msra.mxu0 0.0
  %247 = vmatprep.subr.mxu0 0.0
  %248 = vmatpush2.msra.mxu0 0.0
  %249 = vmatprep.subr.mxu0 0.0
  %250 = vmatpush2.msra.mxu0 0.0
  %251 = vmatprep.subr.mxu0 0.0
  %252 = vmatpush2.msra.mxu0 0.0
  %253 = vmatprep.subr.mxu0 0.0
  %254 = vmatpush2.msra.mxu0 0.0
  %255 = vmatprep.subr.mxu0 0.0
  %256 = vmatpush2.msra.mxu0 0.0
  %257 = vmatprep.subr.mxu0 0.0
  %258 = vmatpush2.msra.mxu0 0.0
  %259 = vmatprep.subr.mxu0 0.0
  %260 = vmatpush2.msra.mxu0 0.0
  %261 = vmatprep.subr.mxu0 0.0
  %262 = vmatpush2.msra.mxu0 0.0
  %263 = vmatprep.subr.mxu0 0.0
  %264 = vmatpush2.msra.mxu0 0.0
  %265 = vmatprep.subr.mxu0 0.0
  %266 = vmatpush2.msra.mxu0 0.0
  %267 = vmatprep.subr.mxu0 0.0
  %268 = vmatpush2.msra.mxu0 0.0
  %269 = vmatprep.subr.mxu0 0.0
  %270 = vmatpush2.msra.mxu0 0.0
  %271 = vmatprep.subr.mxu0 0.0
  %272 = vmatpush2.msra.mxu0 0.0
  %273 = vmatprep.subr.mxu0 0.0
  %274 = vmatpush2.msra.mxu0 0.0
  %275 = vmatprep.mubr.f32.mxu0 0.0
  %276 = vmatmul.mubr.f32.gmra.mxu0 %v203
  %v277 = vpop.f32.mrf.mxu0
  %v278 = vadd.f32 0.0, %v277
  %v279 = vpop.f32.mrf.mxu0
  %280 = vmatprep.mubr.f32.mxu0 0.0
  %281 = vmatmul.mubr.f32.gmra.mxu0 %v206
  %v282 = vpop.f32.mrf.mxu0
  %v283 = vadd.f32 0.0, %v282
  %v284 = vpop.f32.mrf.mxu0
  %285 = vmatprep.mubr.f32.mxu0 0.0
  %286 = vmatmul.mubr.f32.gmra.mxu0 %v209
  %v287 = vpop.f32.mrf.mxu0
  %v288 = vadd.f32 0.0, %v287
  %v289 = vpop.f32.mrf.mxu0
  %290 = vdwg.mxu0
  %v291 = vadd.f32 %v167, %v278
  %v292 = vadd.f32 %v168, %v283
  %v293 = vadd.f32 %v169, %v288
  %vm294 = vcmask 195584
  %295 = vst.msk [vmem:[%s3] sm:$0xff] %vm294, %v291
  %296 = vst.msk [vmem:[%s3 + $0x8] sm:$0xff] %vm294, %v292
  %297 = vst.msk [vmem:[%s3 + $0x10] sm:$0xff] %vm294, %v293
  %s298 = sadd.s32 0, 0
  %p299 = scmp.lt.s32.totalorder %s298, 0
  %s300 = scalar_select %p299, %s298, 0
  %s301 = smul.addr %s300, 8
  %s302 = scalar_lea.vmem %s2, %s301
  // Predicated region
  $region14: #{ultimus_forward.2} parent=0 // pred_check
    _
  $region15: #{ultimus_forward.2} parent=0 // pred_check_branch
    %304 = sbr.rel (0) target = $region17
  $region16: #{ultimus_forward.2} parent=0 // pred_region
    %s305 = sadd.s32 0, 0
  $region17: #{ultimus_forward.2} parent=0 // pred_fallthru
    _
  // Predicated region
  $region18: #{ultimus_forward.2} parent=0 // pred_check
    _
  $region19: #{ultimus_forward.2} parent=0 // pred_check_branch
    %307 = sbr.rel (0) target = $region21
  $region20: #{ultimus_forward.2} parent=0 // pred_region
    _
  $region21: #{ultimus_forward.2} parent=0 // pred_fallthru
    _
  // Predicated region
  $region22: #{ultimus_forward.2} parent=0 // pred_check
    _
  $region23: #{ultimus_forward.2} parent=0 // pred_check_branch
    %309 = sbr.rel (0) target = $region25
  $region24: #{ultimus_forward.2} parent=0 // pred_region
    %s310 = sadd.s32 0, 0
    %p311 = scmp.lt.s32.totalorder %s310, 0
    %s312 = scalar_select %p311, %s310, 0
    %s313 = smul.addr %s312, 8
    %s314 = scalar_lea.vmem %s2, %s313
  $region25: #{ultimus_forward.2} parent=0 // pred_fallthru
    _
  // Predicated region
  $region26: #{ultimus_forward.2} parent=0 // pred_check
    _
  $region27: #{ultimus_forward.2} parent=0 // pred_check_branch
    %316 = sbr.rel (0) target = $region29
  $region28: #{ultimus_forward.2} parent=0 // pred_region
    _
  $region29: #{ultimus_forward.2} parent=0 // pred_fallthru
    _

</llo_original>
